<compile_context>
chip_gen: v7x
topology: tpu7x:2x2x1
jax: 0.10.0
libtpu: 0.0.40
codegen_flags: <defaults>
</compile_context>

<pallas_src>
import functools

import jax
import jax.numpy as jnp
from jax.experimental import pallas as pl
from jax.experimental.pallas import tpu as pltpu


def _round_up(x: int, m: int) -> int:
    return ((x + m - 1) // m) * m


def _cclinear_kernel(x_ref, w_ref, cm_ref, b_ref, o_ref, acc_ref, corr_ref,
                     *, use_bf16_mxu: bool):
    k = pl.program_id(2)

    @pl.when(k == 0)
    def _init():
        acc_ref[...] = jnp.zeros_like(acc_ref)
        corr_ref[...] = jnp.zeros_like(corr_ref)

    x = x_ref[...]                       # (tm, tk)
    w = w_ref[...]                       # (tn, tk)

    if use_bf16_mxu:
        xm = x.astype(jnp.bfloat16)
        wm = w.astype(jnp.bfloat16)
    else:
        xm, wm = x, w

    # Main matmul: acc += x @ W.T   (MXU, f32 accumulation)
    acc_ref[...] += jax.lax.dot_general(
        xm, wm,
        dimension_numbers=(((1,), (1,)), ((), ())),
        preferred_element_type=jnp.float32)

    # Rank-1 column-centering correction: corr[m] += sum_k x[m,k] * col_mean[k]
    # VPU multiply + XLU lane-reduce; kept in f32 so centering is unaffected by
    # bf16 rounding of the MXU path.
    x32 = x.astype(jnp.float32)
    cm32 = cm_ref[...].astype(jnp.float32)           # (1, tk), broadcasts
    corr_ref[...] += jnp.sum(x32 * cm32, axis=1, keepdims=True)

    @pl.when(k == pl.num_programs(2) - 1)
    def _epilogue():
        y = acc_ref[...] - corr_ref[...] + b_ref[...].astype(jnp.float32)
        o_ref[...] = y.astype(o_ref.dtype)


@functools.partial(jax.jit, static_argnames=("use_bf16_mxu", "tm", "tn", "tk"))
def cclinear_forward(x, weight, bias=None, *, use_bf16_mxu: bool = False,
                     tm: int = 256, tn: int = 512, tk: int = 512):
    """x: (M, K); weight: (N, K); bias: (N,) or None. Returns (M, N) in x.dtype.

    Default tiles (256/512/512) fit comfortably in VMEM on v5e/v6e/v7x
    (~4.5 MiB incl. double buffers + accumulator); they are clamped to the
    (padded) problem size so small shapes still work.
    """
    M, K = x.shape
    N, K2 = weight.shape
    assert K == K2, "in_features mismatch"

    f32 = jnp.float32
    # Wrapper-side centering reductions (cheap vs the matmul, always in f32).
    col_mean = jnp.mean(weight.astype(f32), axis=0, keepdims=True)       # (1, K)
    if bias is None:
        b_c = jnp.zeros((1, N), f32)
    else:
        bias_f32 = bias.astype(f32)
        b_c = (bias_f32 - jnp.mean(bias_f32)).reshape(1, N)              # (1, N)

    # Clamp tile sizes to the padded problem; keep lane dims 128-multiples and
    # sublane dims 8-multiples so all loads/stores are unmasked / lane-dense.
    tm = min(tm, _round_up(M, 8))
    tn = min(tn, _round_up(N, 128))
    tk = min(tk, _round_up(K, 128))
    Mp, Np, Kp = _round_up(M, tm), _round_up(N, tn), _round_up(K, tk)

    xp = jnp.pad(x, ((0, Mp - M), (0, Kp - K)))
    wp = jnp.pad(weight, ((0, Np - N), (0, Kp - K)))
    cm_p = jnp.pad(col_mean, ((0, 0), (0, Kp - K)))
    b_p = jnp.pad(b_c, ((0, 0), (0, Np - N)))

    grid = (Mp // tm, Np // tn, Kp // tk)
    itemsize = jnp.dtype(x.dtype).itemsize

    out = pl.pallas_call(
        functools.partial(_cclinear_kernel, use_bf16_mxu=use_bf16_mxu),
        out_shape=jax.ShapeDtypeStruct((Mp, Np), x.dtype),
        grid=grid,
        in_specs=[
            pl.BlockSpec((tm, tk), lambda i, j, k: (i, k)),   # x
            pl.BlockSpec((tn, tk), lambda i, j, k: (j, k)),   # W
            pl.BlockSpec((1, tk), lambda i, j, k: (0, k)),    # col_mean
            pl.BlockSpec((1, tn), lambda i, j, k: (0, j)),    # centered bias
        ],
        out_specs=pl.BlockSpec((tm, tn), lambda i, j, k: (i, j)),
        scratch_shapes=[
            pltpu.VMEM((tm, tn), jnp.float32),   # matmul accumulator
            pltpu.VMEM((tm, 1), jnp.float32),    # rank-1 correction accumulator
        ],
        compiler_params=pltpu.CompilerParams(
            dimension_semantics=("parallel", "parallel", "arbitrary"),
            vmem_limit_bytes=64 << 20),
        cost_estimate=pl.CostEstimate(
            flops=2 * Mp * Np * Kp + 2 * Mp * Kp,
            transcendentals=0,
            bytes_accessed=(Mp * Kp * itemsize + Np * Kp * itemsize
                            + Kp * 4 + Np * 4 + Mp * Np * itemsize)),
    )(xp, wp, cm_p, b_p)

    return out[:M, :N]


def _reference(x, weight, bias):
    w_c = weight - jnp.mean(weight, axis=0, keepdims=True)
    b_c = bias - jnp.mean(bias)
    return x @ w_c.T + b_c


# TODO(synk): the PyTorch module re-assigns self.weight / self.bias (re-centers
# them in place on every training-mode call); that cross-call Parameter
# mutation is host-side module state with no kernel equivalent — the kernel
# implements the equivalent single forward pass.

if __name__ == "__main__":
    # Small shapes consistent with the module: batch of 8 rows, hidden 32 -> 16.
    M, in_features, out_features = 8, 32, 16

    key = jax.random.PRNGKey(0)
    kx, kw, kb = jax.random.split(key, 3)

    # Deterministic init mimicking nn.Linear reset_parameters bounds.
    bound = 1.0 / (in_features ** 0.5)
    weight = jax.random.uniform(kw, (out_features, in_features), jnp.float32,
                                minval=-bound, maxval=bound)
    bias = jax.random.uniform(kb, (out_features,), jnp.float32,
                              minval=-bound, maxval=bound)
    x = jax.random.normal(kx, (M, in_features), jnp.float32)

    y_ref = _reference(x, weight, bias)

    # Default path: f32 on the MXU — matches the PyTorch forward numerics.
    y = cclinear_forward(x, weight, bias)
    jax.block_until_ready(y)
    assert y.shape == (M, out_features)
    assert jnp.allclose(y, y_ref, atol=1e-5, rtol=1e-5), "f32 path mismatch"

    # Optional perf path: bf16 inputs on the MXU, f32 accumulate + f32 centering.
    y_bf16 = cclinear_forward(x, weight, bias, use_bf16_mxu=True)
    jax.block_until_ready(y_bf16)
    assert jnp.allclose(y_bf16, y_ref, atol=5e-2, rtol=5e-2), "bf16 path mismatch"

    print("KERNEL_OK")
</pallas_src>

<mosaic_0001>
module attributes {stable_mosaic.version = 11 : i64} {
  func.func @_cclinear_kernel(%arg0: i32, %arg1: i32, %arg2: i32, %arg3: memref<8x128xf32, #tpu.memory_space<vmem>>, %arg4: memref<128x128xf32, #tpu.memory_space<vmem>>, %arg5: memref<1x128xf32, #tpu.memory_space<vmem>>, %arg6: memref<1x128xf32, #tpu.memory_space<vmem>>, %arg7: memref<8x128xf32, #tpu.memory_space<vmem>>, %arg8: memref<8x128xf32, #tpu.memory_space<vmem>>, %arg9: memref<8x1xf32, #tpu.memory_space<vmem>>) attributes {dimension_semantics = [#tpu.dimension_semantics<parallel>, #tpu.dimension_semantics<parallel>, #tpu.dimension_semantics<arbitrary>], iteration_bounds = array<i64: 1, 1, 1>, scalar_prefetch = 0 : i64, scratch_operands = 2 : i64, tpu.core_type = #tpu.core_type<tc>, window_params = [{transform_indices = @transform_0, window_bounds = array<i64: 8, 128>}, {transform_indices = @transform_1, window_bounds = array<i64: 128, 128>}, {transform_indices = @transform_2, window_bounds = array<i64: 1, 128>}, {transform_indices = @transform_3, window_bounds = array<i64: 1, 128>}, {transform_indices = @transform_4, window_bounds = array<i64: 8, 128>}]} {
    %c0_i32 = arith.constant 0 : i32
    %0 = arith.cmpi eq, %arg2, %c0_i32 : i32
    %1 = arith.extui %0 : i1 to i32
    %c0_i32_0 = arith.constant 0 : i32
    %2 = arith.cmpi ne, %1, %c0_i32_0 : i32
    scf.if %2 {
      %cst_17 = arith.constant 0.000000e+00 : f32
      %20 = vector.broadcast %cst_17 : f32 to vector<8x128xf32>
      %c0_18 = arith.constant 0 : index
      %c0_19 = arith.constant 0 : index
      %21 = vector.load %arg8[%c0_18, %c0_19] : memref<8x128xf32, #tpu.memory_space<vmem>>, vector<8x128xf32>
      tpu.vector_store %arg8[%c0_18, %c0_19], %20 {strides = array<i32>} : memref<8x128xf32, #tpu.memory_space<vmem>>, vector<8x128xf32>,
      %cst_20 = arith.constant 0.000000e+00 : f32
      %22 = vector.broadcast %cst_20 : f32 to vector<8x1xf32>
      %c0_21 = arith.constant 0 : index
      %c0_22 = arith.constant 0 : index
      %23 = vector.load %arg9[%c0_21, %c0_22] : memref<8x1xf32, #tpu.memory_space<vmem>>, vector<8x1xf32>
      tpu.vector_store %arg9[%c0_21, %c0_22], %22 {strides = array<i32>} : memref<8x1xf32, #tpu.memory_space<vmem>>, vector<8x1xf32>,
    } else {
    }
    %c0 = arith.constant 0 : index
    %c0_1 = arith.constant 0 : index
    %3 = vector.load %arg3[%c0, %c0_1] : memref<8x128xf32, #tpu.memory_space<vmem>>, vector<8x128xf32>
    %c0_2 = arith.constant 0 : index
    %c0_3 = arith.constant 0 : index
    %4 = vector.load %arg4[%c0_2, %c0_3] : memref<128x128xf32, #tpu.memory_space<vmem>>, vector<128x128xf32>
    %c0_4 = arith.constant 0 : index
    %c0_5 = arith.constant 0 : index
    %5 = vector.load %arg8[%c0_4, %c0_5] : memref<8x128xf32, #tpu.memory_space<vmem>>, vector<8x128xf32>
    %cst = arith.constant dense<0.000000e+00> : vector<8x128xf32>
    %6 = tpu.matmul %3, %4, %cst {dimension_numbers = #tpu.dot_dimension_numbers<[1], [1], [0], [0], [0, 0, 1, 0], [], []>} : vector<8x128xf32>, vector<128x128xf32>, vector<8x128xf32> -> vector<8x128xf32>
    %7 = arith.addf %5, %6 : vector<8x128xf32>
    %c0_6 = arith.constant 0 : index
    %c0_7 = arith.constant 0 : index
    %8 = vector.load %arg8[%c0_6, %c0_7] : memref<8x128xf32, #tpu.memory_space<vmem>>, vector<8x128xf32>
    tpu.vector_store %arg8[%c0_6, %c0_7], %7 {strides = array<i32>} : memref<8x128xf32, #tpu.memory_space<vmem>>, vector<8x128xf32>,
    %c0_8 = arith.constant 0 : index
    %c0_9 = arith.constant 0 : index
    %9 = vector.load %arg5[%c0_8, %c0_9] : memref<1x128xf32, #tpu.memory_space<vmem>>, vector<1x128xf32>
    %c0_10 = arith.constant 0 : index
    %c0_11 = arith.constant 0 : index
    %10 = vector.load %arg9[%c0_10, %c0_11] : memref<8x1xf32, #tpu.memory_space<vmem>>, vector<8x1xf32>
    %11 = vector.broadcast %9 : vector<1x128xf32> to vector<8x128xf32>
    %12 = arith.mulf %3, %11 : vector<8x128xf32>
    %cst_12 = arith.constant dense<0.000000e+00> : vector<8xf32>
    %13 = vector.multi_reduction <add>, %12, %cst_12 [1] : vector<8x128xf32> to vector<8xf32>
    %14 = vector.shape_cast %13 : vector<8xf32> to vector<8x1xf32>
    %15 = arith.addf %10, %14 : vector<8x1xf32>
    %c0_13 = arith.constant 0 : index
    %c0_14 = arith.constant 0 : index
    %16 = vector.load %arg9[%c0_13, %c0_14] : memref<8x1xf32, #tpu.memory_space<vmem>>, vector<8x1xf32>
    tpu.vector_store %arg9[%c0_13, %c0_14], %15 {strides = array<i32>} : memref<8x1xf32, #tpu.memory_space<vmem>>, vector<8x1xf32>,
    %c0_i32_15 = arith.constant 0 : i32
    %17 = arith.cmpi eq, %arg2, %c0_i32_15 : i32
    %18 = arith.extui %17 : i1 to i32
    %c0_i32_16 = arith.constant 0 : i32
    %19 = arith.cmpi ne, %18, %c0_i32_16 : i32
    scf.if %19 {
      %c0_17 = arith.constant 0 : index
      %c0_18 = arith.constant 0 : index
      %20 = vector.load %arg8[%c0_17, %c0_18] : memref<8x128xf32, #tpu.memory_space<vmem>>, vector<8x128xf32>
      %c0_19 = arith.constant 0 : index
      %c0_20 = arith.constant 0 : index
      %21 = vector.load %arg9[%c0_19, %c0_20] : memref<8x1xf32, #tpu.memory_space<vmem>>, vector<8x1xf32>
      %22 = vector.broadcast %21 : vector<8x1xf32> to vector<8x128xf32>
      %23 = arith.subf %20, %22 : vector<8x128xf32>
      %c0_21 = arith.constant 0 : index
      %c0_22 = arith.constant 0 : index
      %24 = vector.load %arg6[%c0_21, %c0_22] : memref<1x128xf32, #tpu.memory_space<vmem>>, vector<1x128xf32>
      %25 = vector.broadcast %24 : vector<1x128xf32> to vector<8x128xf32>
      %26 = arith.addf %23, %25 : vector<8x128xf32>
      %c0_23 = arith.constant 0 : index
      %c0_24 = arith.constant 0 : index
      %27 = vector.load %arg7[%c0_23, %c0_24] : memref<8x128xf32, #tpu.memory_space<vmem>>, vector<8x128xf32>
      tpu.vector_store %arg7[%c0_23, %c0_24], %26 {strides = array<i32>} : memref<8x128xf32, #tpu.memory_space<vmem>>, vector<8x128xf32>,
    } else {
    }
    return
  }
  func.func @transform_0(%arg0: i32, %arg1: i32, %arg2: i32) -> (i32, i32) {
    %c0_i32 = arith.constant 0 : i32
    return %arg0, %arg2 : i32, i32
  }
  func.func @transform_1(%arg0: i32, %arg1: i32, %arg2: i32) -> (i32, i32) {
    %c0_i32 = arith.constant 0 : i32
    return %arg1, %arg2 : i32, i32
  }
  func.func @transform_2(%arg0: i32, %arg1: i32, %arg2: i32) -> (i32, i32) {
    %c0_i32 = arith.constant 0 : i32
    %c0_i32_0 = arith.constant 0 : i32
    return %c0_i32, %arg2 : i32, i32
  }
  func.func @transform_3(%arg0: i32, %arg1: i32, %arg2: i32) -> (i32, i32) {
    %c0_i32 = arith.constant 0 : i32
    %c0_i32_0 = arith.constant 0 : i32
    return %c0_i32, %arg1 : i32, i32
  }
  func.func @transform_4(%arg0: i32, %arg1: i32, %arg2: i32) -> (i32, i32) {
    %c0_i32 = arith.constant 0 : i32
    return %arg0, %arg1 : i32, i32
  }
}

</mosaic_0001>

<llo_original>
// kernel: cclinear_forward.1
$region0: #{cclinear_forward.1}
  #allocation0 [shape = 'u32[]', space=smem, size = 0x4, offset = 0x4, fixed_abs, tag = 'smem constant byte address 0x4 - core index']
  #allocation1 [shape = 'u32[144,128]{1,0:T(1,128)}', space=vmem, size = 0x12000, scoped, tag = 'internal scratch']
  #allocation2 [shape = 'f32[8,128]{1,0:T(8,128)}', space=vmem, size = 0x1000, scoped, tag = 'scratch operand']
  #allocation3 [shape = 'f32[8,1]{1,0:T(8,128)}', space=vmem, size = 0x1000, scoped, tag = 'scratch operand']
  %s0 = inlined_call_operand.hbm [shape: f32[8,128], index: 0, kind: input, shape index: {}]
  %s1 = inlined_call_operand.hbm [shape: f32[128,128], index: 1, kind: input, shape index: {}]
  %s2 = inlined_call_operand.hbm [shape: f32[1,128], index: 2, kind: input, shape index: {}]
  %s3 = inlined_call_operand.hbm [shape: f32[1,128], index: 3, kind: input, shape index: {}]
  %s4 = inlined_call_operand.hbm [shape: f32[8,128], index: 4, kind: output, shape index: {}]
  %s5 = sld [smem:[#allocation0]]
  $region50: #{cclinear_forward.1} parent=0
    _
  %s7 = ssub.s32 1, %s5
  %s8 = scalar_select 0, %s7, %s5
  $region1: #{cclinear_forward.1} parent=0
    #allocation4 [shape = 'u8[4096]{0}', space=vmem, size = 0x1000, scoped, tag = 'input window, operand 0, single buffered']
    #allocation5 [shape = 's32[1]{0}', space=sflag, size = 0x4, scoped, tag = 'scoped memory for cclinear_forward.1']
    #allocation6 [shape = 's32[1]{0}', space=sflag, size = 0x4, scoped, tag = 'scoped memory for cclinear_forward.1']
    #allocation7 [shape = 'u8[65536]{0}', space=vmem, size = 0x10000, scoped, tag = 'input window, operand 1, single buffered']
    #allocation8 [shape = 's32[1]{0}', space=sflag, size = 0x4, scoped, tag = 'scoped memory for cclinear_forward.1']
    #allocation9 [shape = 'u8[512]{0}', space=vmem, size = 0x400, scoped, tag = 'input window, operand 2, single buffered']
    #allocation10 [shape = 'u8[512]{0}', space=vmem, size = 0x400, scoped, tag = 'input window, operand 3, single buffered']
    #allocation11 [shape = 's32[1]{0}', space=sflag, size = 0x4, scoped, tag = 'scoped memory for cclinear_forward.1']
    #allocation12 [shape = 'u8[4096]{0}', space=vmem, size = 0x1000, scoped, tag = 'output window, operand 0, single buffered']
    %9 = vsyncpa [#allocation5], 0
    %10 = vsyncpa [#allocation8], 0
    %11 = vsyncpa [#allocation11], 0
    %12 = vsyncpa [#allocation6], 0
    // Predicated region
    $region2: #{cclinear_forward.1} parent=1 // pred_check
      _
    $region3: #{cclinear_forward.1} parent=1 // pred_check_branch
      %14 = sbr.rel (0) target = $region5
    $region4: #{cclinear_forward.1} parent=1 // pred_region
      %s16 = ssub.s32 128, 128
      %17 = vsyncadd [#allocation5], %s16
      %s19 = sshll.u32 [#allocation4], 4
      %s20 = int_to_ptr.vmem [resolvable:$true] %s19
      %22 = dma.hbm_to_vmem [thread:$0]  %s0, 128, %s20, [#allocation5]
    $region5: #{cclinear_forward.1} parent=1 // pred_fallthru
      _
    // Predicated region
    $region6: #{cclinear_forward.1} parent=1 // pred_check
      _
    $region7: #{cclinear_forward.1} parent=1 // pred_check_branch
      %24 = sbr.rel (0) target = $region9
    $region8: #{cclinear_forward.1} parent=1 // pred_region
      %s26 = ssub.s32 2048, 2048
      %27 = vsyncadd [#allocation8], %s26
      %s28 = sshll.u32 [#allocation7], 4
      %s29 = int_to_ptr.vmem [resolvable:$true] %s28
      %34 = dma.hbm_to_vmem [thread:$0]  %s1, 2048, %s29, [#allocation8], 128, 128, 8
    $region9: #{cclinear_forward.1} parent=1 // pred_fallthru
      _
    // Predicated region
    $region10: #{cclinear_forward.1} parent=1 // pred_check
      _
    $region11: #{cclinear_forward.1} parent=1 // pred_check_branch
      %36 = sbr.rel (0) target = $region13
    $region12: #{cclinear_forward.1} parent=1 // pred_region
      %s38 = ssub.s32 16, 16
      %39 = vsyncadd [#allocation8], %s38
      %s41 = sshll.u32 [#allocation9], 4
      %s42 = int_to_ptr.vmem [resolvable:$true] %s41
      %44 = dma.hbm_to_vmem [thread:$0]  %s2, 16, %s42, [#allocation8]
    $region13: #{cclinear_forward.1} parent=1 // pred_fallthru
      _
    // Predicated region
    $region14: #{cclinear_forward.1} parent=1 // pred_check
      _
    $region15: #{cclinear_forward.1} parent=1 // pred_check_branch
      %46 = sbr.rel (0) target = $region17
    $region16: #{cclinear_forward.1} parent=1 // pred_region
      %s48 = ssub.s32 16, 16
      %49 = vsyncadd [#allocation11], %s48
      %s51 = sshll.u32 [#allocation10], 4
      %s52 = int_to_ptr.vmem [resolvable:$true] %s51
      %54 = dma.hbm_to_vmem [thread:$0]  %s3, 16, %s52, [#allocation11]
    $region17: #{cclinear_forward.1} parent=1 // pred_fallthru
      _
    // Predicated region
    $region18: #{cclinear_forward.1} parent=1 // pred_check
      _
    $region19: #{cclinear_forward.1} parent=1 // pred_check_branch
      %56 = sbr.rel (0) target = $region21
    $region20: #{cclinear_forward.1} parent=1 // pred_region
      %57 = dma.done [#allocation5], 128
    $region21: #{cclinear_forward.1} parent=1 // pred_fallthru
      _
    // Predicated region
    $region22: #{cclinear_forward.1} parent=1 // pred_check
      _
    $region23: #{cclinear_forward.1} parent=1 // pred_check_branch
      %59 = sbr.rel (0) target = $region25
    $region24: #{cclinear_forward.1} parent=1 // pred_region
      %60 = dma.done [#allocation8], 2048
    $region25: #{cclinear_forward.1} parent=1 // pred_fallthru
      _
    // Predicated region
    $region26: #{cclinear_forward.1} parent=1 // pred_check
      _
    $region27: #{cclinear_forward.1} parent=1 // pred_check_branch
      %62 = sbr.rel (0) target = $region29
    $region28: #{cclinear_forward.1} parent=1 // pred_region
      %63 = dma.done [#allocation8], 16
    $region29: #{cclinear_forward.1} parent=1 // pred_fallthru
      _
    // Predicated region
    $region30: #{cclinear_forward.1} parent=1 // pred_check
      _
    $region31: #{cclinear_forward.1} parent=1 // pred_check_branch
      %65 = sbr.rel (0) target = $region33
    $region32: #{cclinear_forward.1} parent=1 // pred_region
      %66 = dma.done [#allocation11], 16
    $region33: #{cclinear_forward.1} parent=1 // pred_fallthru
      _
    %p67 = scmp.eq.s32.totalorder 0, 0
    // Predicated region
    $region34: #{cclinear_forward.1} parent=1 // pred_check
      %p68 = pneg %p67
    $region35: #{cclinear_forward.1} parent=1 // pred_check_branch
      %70 = sbr.rel (%p68) target = $region37
    $region36: #{cclinear_forward.1} parent=1 // pred_region
      %71 = vst [vmem:[#allocation2] sm:$0xff] 0.0
      %vm72 = vcmask 7168
      %73 = vst.msk [vmem:[#allocation3] sm:$0xff] %vm72, 0.0
    $region37: #{cclinear_forward.1} parent=1 // pred_fallthru
      _
    %v74 = vld [vmem:[#allocation4] sm:$0xff]
    %v75 = vld [vmem:[#allocation7] sm:$0xff]
    %v76 = vld [vmem:[#allocation7 + $0x8] sm:$0xff]
    %v77 = vld [vmem:[#allocation7 + $0x10] sm:$0xff]
    %v78 = vld [vmem:[#allocation7 + $0x18] sm:$0xff]
    %v79 = vld [vmem:[#allocation7 + $0x20] sm:$0xff]
    %v80 = vld [vmem:[#allocation7 + $0x28] sm:$0xff]
    %v81 = vld [vmem:[#allocation7 + $0x30] sm:$0xff]
    %v82 = vld [vmem:[#allocation7 + $0x38] sm:$0xff]
    %v83 = vld [vmem:[#allocation7 + $0x40] sm:$0xff]
    %v84 = vld [vmem:[#allocation7 + $0x48] sm:$0xff]
    %v85 = vld [vmem:[#allocation7 + $0x50] sm:$0xff]
    %v86 = vld [vmem:[#allocation7 + $0x58] sm:$0xff]
    %v87 = vld [vmem:[#allocation7 + $0x60] sm:$0xff]
    %v88 = vld [vmem:[#allocation7 + $0x68] sm:$0xff]
    %v89 = vld [vmem:[#allocation7 + $0x70] sm:$0xff]
    %v90 = vld [vmem:[#allocation7 + $0x78] sm:$0xff]
    %v91 = vld [vmem:[#allocation2] sm:$0xff]
    %92 = vmatprep.subr.mxu0 0.0
    %93 = vmatpush1.xpose.msra.mxu0 %v75
    %94 = vmatprep.subr.mxu0 0.0
    %95 = vmatpush1.xpose.msra.mxu0 %v76
    %96 = vmatprep.subr.mxu0 0.0
    %97 = vmatpush1.xpose.msra.mxu0 %v77
    %98 = vmatprep.subr.mxu0 0.0
    %99 = vmatpush1.xpose.msra.mxu0 %v78
    %100 = vmatprep.subr.mxu0 0.0
    %101 = vmatpush1.xpose.msra.mxu0 %v79
    %102 = vmatprep.subr.mxu0 0.0
    %103 = vmatpush1.xpose.msra.mxu0 %v80
    %104 = vmatprep.subr.mxu0 0.0
    %105 = vmatpush1.xpose.msra.mxu0 %v81
    %106 = vmatprep.subr.mxu0 0.0
    %107 = vmatpush1.xpose.msra.mxu0 %v82
    %108 = vmatprep.subr.mxu0 0.0
    %109 = vmatpush1.xpose.msra.mxu0 %v83
    %110 = vmatprep.subr.mxu0 0.0
    %111 = vmatpush1.xpose.msra.mxu0 %v84
    %112 = vmatprep.subr.mxu0 0.0
    %113 = vmatpush1.xpose.msra.mxu0 %v85
    %114 = vmatprep.subr.mxu0 0.0
    %115 = vmatpush1.xpose.msra.mxu0 %v86
    %116 = vmatprep.subr.mxu0 0.0
    %117 = vmatpush1.xpose.msra.mxu0 %v87
    %118 = vmatprep.subr.mxu0 0.0
    %119 = vmatpush1.xpose.msra.mxu0 %v88
    %120 = vmatprep.subr.mxu0 0.0
    %121 = vmatpush1.xpose.msra.mxu0 %v89
    %122 = vmatprep.subr.mxu0 0.0
    %123 = vmatpush1.xpose.msra.mxu0 %v90
    %124 = vmatprep.subr.mxu0 0.0
    %125 = vmatpush1.xpose.msra.mxu0 0.0
    %126 = vmatprep.subr.mxu0 0.0
    %127 = vmatpush1.xpose.msra.mxu0 0.0
    %128 = vmatprep.subr.mxu0 0.0
    %129 = vmatpush1.xpose.msra.mxu0 0.0
    %130 = vmatprep.subr.mxu0 0.0
    %131 = vmatpush1.xpose.msra.mxu0 0.0
    %132 = vmatprep.subr.mxu0 0.0
    %133 = vmatpush1.xpose.msra.mxu0 0.0
    %134 = vmatprep.subr.mxu0 0.0
    %135 = vmatpush1.xpose.msra.mxu0 0.0
    %136 = vmatprep.subr.mxu0 0.0
    %137 = vmatpush1.xpose.msra.mxu0 0.0
    %138 = vmatprep.subr.mxu0 0.0
    %139 = vmatpush1.xpose.msra.mxu0 0.0
    %140 = vmatprep.subr.mxu0 0.0
    %141 = vmatpush1.xpose.msra.mxu0 0.0
    %142 = vmatprep.subr.mxu0 0.0
    %143 = vmatpush1.xpose.msra.mxu0 0.0
    %144 = vmatprep.subr.mxu0 0.0
    %145 = vmatpush1.xpose.msra.mxu0 0.0
    %146 = vmatprep.subr.mxu0 0.0
    %147 = vmatpush1.xpose.msra.mxu0 0.0
    %148 = vmatprep.subr.mxu0 0.0
    %149 = vmatpush1.xpose.msra.mxu0 0.0
    %150 = vmatprep.subr.mxu0 0.0
    %151 = vmatpush1.xpose.msra.mxu0 0.0
    %152 = vmatprep.subr.mxu0 0.0
    %153 = vmatpush1.xpose.msra.mxu0 0.0
    %154 = vmatprep.subr.mxu0 0.0
    %155 = vmatpush1.xpose.msra.mxu0 0.0
    %156 = vmatprep.mubr.f32.mxu0 0.0
    %157 = vmatmul.mubr.f32.gmra.mrb[0].mxu0 %v74
    %v158 = vpop.f32.mrb[0].mxu0
    %v159 = vadd.f32 0.0, %v158
    %v160 = vpop.f32.mrb[0].mxu0
    %161 = vdwg.mxu0
    %v162 = vadd.f32 %v91, %v159
    %163 = vst [vmem:[#allocation2] sm:$0xff] %v162
    %v164 = vld [vmem:[#allocation9] sm:$0x1]
    %v165 = vld [vmem:[#allocation3] sm:$0xff]
    %v167 = vlaneseq
    %v168 = vshrl.u32 %v167, 7
    %v169 = vsub.s32 0, %v168
    %v170 = vrot.slane %v164, %v169
    %v172 = vmul.f32 %v74, %v170
    %173 = vadd.xlane.f32.xlu0 %v172
    %v174 = vpop.xlane.xlu0 %173
    %v175 = vadd.f32 %v165, %v174
    %vm176 = vcmask 7168
    %177 = vst.msk [vmem:[#allocation3] sm:$0xff] %vm176, %v175
    // Predicated region
    $region38: #{cclinear_forward.1} parent=1 // pred_check
      %p178 = pneg %p67
    $region39: #{cclinear_forward.1} parent=1 // pred_check_branch
      %180 = sbr.rel (%p178) target = $region41
    $region40: #{cclinear_forward.1} parent=1 // pred_region
      %v181 = vld [vmem:[#allocation2] sm:$0xff]
      %v182 = vld [vmem:[#allocation3] sm:$0xff]
      %184 = vset.pattern.permute.xlu0 0
      %185 = vperm.xlu0 %184, %v182
      %v186 = vpop.permute.xlu0 %185
      %v188 = vsub.f32 %v181, %v186
      %v189 = vld [vmem:[#allocation10] sm:$0x1]
      %v191 = vlaneseq
      %v192 = vshrl.u32 %v191, 7
      %v193 = vsub.s32 0, %v192
      %v194 = vrot.slane %v189, %v193
      %v196 = vadd.f32 %v188, %v194
      %197 = vst [vmem:[#allocation12] sm:$0xff] %v196
    $region41: #{cclinear_forward.1} parent=1 // pred_fallthru
      _
    // Predicated region
    $region42: #{cclinear_forward.1} parent=1 // pred_check
      _
    $region43: #{cclinear_forward.1} parent=1 // pred_check_branch
      %199 = sbr.rel (0) target = $region45
    $region44: #{cclinear_forward.1} parent=1 // pred_region
      %s201 = ssub.s32 128, 128
      %202 = vsyncadd [#allocation6], %s201
      %s204 = sshll.u32 [#allocation12], 4
      %s205 = int_to_ptr.vmem [resolvable:$true] %s204
      %207 = dma.vmem_to_hbm [thread:$0]  %s205, 128, %s4, [#allocation6]
    $region45: #{cclinear_forward.1} parent=1 // pred_fallthru
      _
    // Predicated region
    $region46: #{cclinear_forward.1} parent=1 // pred_check
      _
    $region47: #{cclinear_forward.1} parent=1 // pred_check_branch
      %209 = sbr.rel (0) target = $region49
    $region48: #{cclinear_forward.1} parent=1 // pred_region
      %210 = dma.done [#allocation6], 128
    $region49: #{cclinear_forward.1} parent=1 // pred_fallthru
      _
    %211 = vsyncpa [#allocation5], 1
    %212 = vsyncpa [#allocation8], 1
    %213 = vsyncpa [#allocation11], 1
    %214 = vsyncpa [#allocation6], 1

</llo_original>
